<compile_context>
chip_gen: v7x
topology: tpu7x:2x2x1
jax: 0.10.0
libtpu: 0.0.40
codegen_flags: <defaults>
</compile_context>

<pallas_src>
import jax
import jax.numpy as jnp
from jax import lax
from jax.experimental import pallas as pl
from jax.experimental.pallas import tpu as pltpu

# ---- model config (small, consistent with the module's __init__) ------------
VOCAB_SIZE = 50
EMBED_SIZE = 16          # embedding_size == input_size (fed into cell 0)
INPUT_SIZE = EMBED_SIZE
HIDDEN = 32
NUM_LAYERS = 1
OUTPUT = 8
BIAS = True
BATCH = 8
SEQ = 8
VOCAB_PAD = 128          # one-hot gather K dim, lane-dense
OUT_PAD = 128            # lane-dense padded FC output width


# ---- Pallas kernel: fused gather+projection + unrolled recurrence + FC ------
def lstm_kernel(ids_ref, embproj_ref, whh_ref, wfc_ref, bfc_ref, out_ref):
    B = out_ref.shape[0]
    V = embproj_ref.shape[0]            # padded vocab (128)
    G = embproj_ref.shape[1]            # 4*H
    H = G // 4
    TB = ids_ref.shape[0]
    T = TB // B

    # Fused embedding + input projection.  emb_proj rows already hold
    # embedding @ W_ih + (b_ih + b_hh), with g-gate columns pre-scaled by 2
    # (tanh(z) = 2*sigmoid(2z) - 1 fold).  Gather = one-hot matmul; computed
    # once for all T*B tokens and kept as a traced value (no VMEM scratch).
    ids = ids_ref[...]                                            # (T*B, 1) int32
    onehot = (ids == lax.broadcasted_iota(jnp.int32, (TB, V), 1)
              ).astype(jnp.float32)                               # (T*B, V)
    xproj = jnp.dot(onehot, embproj_ref[...],
                    preferred_element_type=jnp.float32)           # (T*B, 4H)

    w_hh = whh_ref[...]                 # hoisted; g columns pre-scaled by 2

    h = jnp.zeros((B, H), jnp.float32)
    c = jnp.zeros((B, H), jnp.float32)

    # T is tiny and static -> fully unrolled at trace time (live set ~15 vregs,
    # no spill risk); only h @ W_hh sits on the serial critical chain.
    for t in range(T):
        gates = xproj[t * B:(t + 1) * B, :] + jnp.dot(
            h, w_hh, preferred_element_type=jnp.float32)          # (B, 4H)
        sig = jax.nn.sigmoid(gates)     # single EUP pass over [i | f | g' | o]
        i_g = sig[:, 0 * H:1 * H]
        f_g = sig[:, 1 * H:2 * H]
        g_g = 2.0 * sig[:, 2 * H:3 * H] - 1.0   # == tanh(z_g) (cols pre-scaled)
        o_g = sig[:, 3 * H:4 * H]
        c = f_g * c + i_g * g_g
        h = o_g * jnp.tanh(c)

    logits = (jnp.dot(h, wfc_ref[...], preferred_element_type=jnp.float32)
              + bfc_ref[...])                                     # (B, OUT_PAD)
    out_ref[...] = jax.nn.sigmoid(logits)         # unmasked full-vreg store


def prepare_params(params):
    """One-time fusion/padding of raw params into kernel-ready tensors."""
    H = params["w_hh"].shape[0]
    V = params["embedding"].shape[0]
    O = params["w_fc"].shape[1]
    assert V <= VOCAB_PAD and O <= OUT_PAD

    # Pre-scale g-gate columns (2H:3H) by 2 so tanh(z) = 2*sigmoid(2z) - 1.
    gate_scale = jnp.concatenate(
        [jnp.ones((1, 2 * H), jnp.float32),
         jnp.full((1, H), 2.0, jnp.float32),
         jnp.ones((1, H), jnp.float32)], axis=1)

    # Fused embedding-projection table: row v = embedding[v] @ W_ih + b.
    emb_proj = (params["embedding"] @ params["w_ih"] + params["b"]) * gate_scale
    emb_proj = jnp.zeros((VOCAB_PAD, 4 * H), jnp.float32).at[:V, :].set(emb_proj)

    w_hh = params["w_hh"] * gate_scale

    w_fc = jnp.zeros((H, OUT_PAD), jnp.float32).at[:, :O].set(params["w_fc"])
    b_fc = jnp.zeros((1, OUT_PAD), jnp.float32).at[:, :O].set(params["b_fc"])

    return {"emb_proj": emb_proj, "w_hh": w_hh, "w_fc": w_fc, "b_fc": b_fc}


@jax.jit
def simple_lstm_forward(tokens, prep):
    """tokens: (B, T) int32 token ids -> (B, OUTPUT) float32."""
    B, T = tokens.shape
    assert B % 8 == 0 and (T * B) % 8 == 0          # sublane tiling assumptions

    # Time-major flat token ids (tiny int op; fuses under jit).
    ids = jnp.transpose(tokens).reshape(T * B, 1).astype(jnp.int32)

    vmem = pl.BlockSpec(memory_space=pltpu.MemorySpace.VMEM)
    out_p = pl.pallas_call(
        lstm_kernel,
        out_shape=jax.ShapeDtypeStruct((B, OUT_PAD), jnp.float32),
        in_specs=[vmem, vmem, vmem, vmem, vmem],
        out_specs=vmem,
    )(ids, prep["emb_proj"], prep["w_hh"], prep["w_fc"], prep["b_fc"])

    # out = outs[-1].squeeze() in the reference: a no-op for B > 1.
    return out_p[:, :OUTPUT]


# ---- pure-JAX reference (mirrors the PyTorch forward for num_layers == 1) ---
def reference_forward(tokens, params):
    emb = jnp.take(params["embedding"], tokens, axis=0)   # (B, T, E)
    B, T, _ = emb.shape
    H = params["w_hh"].shape[0]
    h = jnp.zeros((B, H), jnp.float32)
    c = jnp.zeros((B, H), jnp.float32)
    for t in range(T):
        x = emb[:, t, :]
        gates = x @ params["w_ih"] + h @ params["w_hh"] + params["b"]
        i_g = jax.nn.sigmoid(gates[:, 0 * H:1 * H])
        f_g = jax.nn.sigmoid(gates[:, 1 * H:2 * H])
        g_g = jnp.tanh(gates[:, 2 * H:3 * H])
        o_g = jax.nn.sigmoid(gates[:, 3 * H:4 * H])
        c = f_g * c + i_g * g_g
        h = o_g * jnp.tanh(c)
    out = h @ params["w_fc"] + params["b_fc"]
    return jax.nn.sigmoid(out)


def init_params(key):
    ks = jax.random.split(key, 7)
    bound = 1.0 / jnp.sqrt(HIDDEN)
    u = lambda k, shape: jax.random.uniform(k, shape, jnp.float32, -bound, bound)
    params = {
        "embedding": jax.random.normal(ks[0], (VOCAB_SIZE, EMBED_SIZE), jnp.float32),
        "w_ih": u(ks[1], (INPUT_SIZE, 4 * HIDDEN)),      # torch weight_ih.T
        "w_hh": u(ks[2], (HIDDEN, 4 * HIDDEN)),          # torch weight_hh.T
        # combined bias (b_ih + b_hh), kept 2-D for lane-major broadcast
        "b": u(ks[3], (1, 4 * HIDDEN)) + u(ks[4], (1, 4 * HIDDEN)) if BIAS
             else jnp.zeros((1, 4 * HIDDEN), jnp.float32),
        "w_fc": u(ks[5], (HIDDEN, OUTPUT)),
        "b_fc": u(ks[6], (1, OUTPUT)),
    }
    return params


if __name__ == "__main__":
    key = jax.random.PRNGKey(0)
    pkey, tkey = jax.random.split(key)
    params = init_params(pkey)
    prep = prepare_params(params)           # one-time weight fusion/padding
    tokens = jax.random.randint(tkey, (BATCH, SEQ), 0, VOCAB_SIZE, jnp.int32)

    out = jax.block_until_ready(simple_lstm_forward(tokens, prep))
    ref = jax.block_until_ready(reference_forward(tokens, params))

    assert out.shape == (BATCH, OUTPUT), out.shape
    # Tolerance slightly looser than 1e-5: the tanh(z)=2*sigmoid(2z)-1 fold uses
    # a different EUP path than the reference tanh; real gate/order bugs would
    # show up as O(1e-1) errors.
    assert jnp.allclose(out, ref, atol=1e-4, rtol=1e-4), \
        f"max abs err = {jnp.max(jnp.abs(out - ref))}"
    print("KERNEL_OK")
</pallas_src>

<mosaic_0001>
module attributes {stable_mosaic.version = 11 : i64} {
  func.func @lstm_kernel(%arg0: memref<64x1xi32, #tpu.memory_space<vmem>>, %arg1: memref<128x128xf32, #tpu.memory_space<vmem>>, %arg2: memref<32x128xf32, #tpu.memory_space<vmem>>, %arg3: memref<32x128xf32, #tpu.memory_space<vmem>>, %arg4: memref<1x128xf32, #tpu.memory_space<vmem>>, %arg5: memref<8x128xf32, #tpu.memory_space<vmem>>) attributes {dimension_semantics = [], scalar_prefetch = 0 : i64, scratch_operands = 0 : i64, tpu.core_type = #tpu.core_type<tc>} {
    %c0 = arith.constant 0 : index
    %c0_0 = arith.constant 0 : index
    %0 = vector.load %arg0[%c0, %c0_0] : memref<64x1xi32, #tpu.memory_space<vmem>>, vector<64x1xi32>
    %1 = tpu.iota {dimensions = array<i32: 1>} : vector<64x128xi32>
    %2 = vector.broadcast %0 : vector<64x1xi32> to vector<64x128xi32>
    %3 = arith.cmpi eq, %2, %1 : vector<64x128xi32>
    %4 = arith.extui %3 : vector<64x128xi1> to vector<64x128xi32>
    %5 = arith.sitofp %4 : vector<64x128xi32> to vector<64x128xf32>
    %c0_1 = arith.constant 0 : index
    %c0_2 = arith.constant 0 : index
    %6 = vector.load %arg1[%c0_1, %c0_2] : memref<128x128xf32, #tpu.memory_space<vmem>>, vector<128x128xf32>
    %cst = arith.constant dense<0.000000e+00> : vector<64x128xf32>
    %7 = tpu.matmul %5, %6, %cst {dimension_numbers = #tpu.dot_dimension_numbers<[1], [0], [0], [1], [0, 0, 1, 1], [], []>} : vector<64x128xf32>, vector<128x128xf32>, vector<64x128xf32> -> vector<64x128xf32>
    %c0_3 = arith.constant 0 : index
    %c0_4 = arith.constant 0 : index
    %8 = vector.load %arg2[%c0_3, %c0_4] : memref<32x128xf32, #tpu.memory_space<vmem>>, vector<32x128xf32>
    %cst_5 = arith.constant 0.000000e+00 : f32
    %9 = vector.broadcast %cst_5 : f32 to vector<8x32xf32>
    %cst_6 = arith.constant 0.000000e+00 : f32
    %10 = vector.broadcast %cst_6 : f32 to vector<8x32xf32>
    %11 = vector.extract_strided_slice %7 {offsets = [0, 0], sizes = [8, 128], strides = [1, 1]} : vector<64x128xf32> to vector<8x128xf32>
    %cst_7 = arith.constant dense<0.000000e+00> : vector<8x128xf32>
    %12 = tpu.matmul %9, %8, %cst_7 {dimension_numbers = #tpu.dot_dimension_numbers<[1], [0], [0], [1], [0, 0, 1, 1], [], []>} : vector<8x32xf32>, vector<32x128xf32>, vector<8x128xf32> -> vector<8x128xf32>
    %13 = arith.addf %11, %12 : vector<8x128xf32>
    %14 = arith.negf %13 : vector<8x128xf32>
    %15 = math.exp %14 : vector<8x128xf32>
    %cst_8 = arith.constant 1.000000e+00 : f32
    %16 = vector.broadcast %cst_8 : f32 to vector<8x128xf32>
    %17 = arith.addf %16, %15 : vector<8x128xf32>
    %18 = arith.divf %16, %17 : vector<8x128xf32>
    %19 = vector.extract_strided_slice %18 {offsets = [0, 0], sizes = [8, 32], strides = [1, 1]} : vector<8x128xf32> to vector<8x32xf32>
    %20 = vector.extract_strided_slice %18 {offsets = [0, 32], sizes = [8, 32], strides = [1, 1]} : vector<8x128xf32> to vector<8x32xf32>
    %21 = vector.extract_strided_slice %18 {offsets = [0, 64], sizes = [8, 32], strides = [1, 1]} : vector<8x128xf32> to vector<8x32xf32>
    %cst_9 = arith.constant 2.000000e+00 : f32
    %22 = vector.broadcast %cst_9 : f32 to vector<8x32xf32>
    %23 = arith.mulf %22, %21 : vector<8x32xf32>
    %cst_10 = arith.constant 1.000000e+00 : f32
    %24 = vector.broadcast %cst_10 : f32 to vector<8x32xf32>
    %25 = arith.subf %23, %24 : vector<8x32xf32>
    %26 = vector.extract_strided_slice %18 {offsets = [0, 96], sizes = [8, 32], strides = [1, 1]} : vector<8x128xf32> to vector<8x32xf32>
    %27 = arith.mulf %20, %10 : vector<8x32xf32>
    %28 = arith.mulf %19, %25 : vector<8x32xf32>
    %29 = arith.addf %27, %28 : vector<8x32xf32>
    %30 = math.tanh %29 : vector<8x32xf32>
    %31 = arith.mulf %26, %30 : vector<8x32xf32>
    %32 = vector.extract_strided_slice %7 {offsets = [8, 0], sizes = [8, 128], strides = [1, 1]} : vector<64x128xf32> to vector<8x128xf32>
    %cst_11 = arith.constant dense<0.000000e+00> : vector<8x128xf32>
    %33 = tpu.matmul %31, %8, %cst_11 {dimension_numbers = #tpu.dot_dimension_numbers<[1], [0], [0], [1], [0, 0, 1, 1], [], []>} : vector<8x32xf32>, vector<32x128xf32>, vector<8x128xf32> -> vector<8x128xf32>
    %34 = arith.addf %32, %33 : vector<8x128xf32>
    %35 = arith.negf %34 : vector<8x128xf32>
    %36 = math.exp %35 : vector<8x128xf32>
    %cst_12 = arith.constant 1.000000e+00 : f32
    %37 = vector.broadcast %cst_12 : f32 to vector<8x128xf32>
    %38 = arith.addf %37, %36 : vector<8x128xf32>
    %39 = arith.divf %37, %38 : vector<8x128xf32>
    %40 = vector.extract_strided_slice %39 {offsets = [0, 0], sizes = [8, 32], strides = [1, 1]} : vector<8x128xf32> to vector<8x32xf32>
    %41 = vector.extract_strided_slice %39 {offsets = [0, 32], sizes = [8, 32], strides = [1, 1]} : vector<8x128xf32> to vector<8x32xf32>
    %42 = vector.extract_strided_slice %39 {offsets = [0, 64], sizes = [8, 32], strides = [1, 1]} : vector<8x128xf32> to vector<8x32xf32>
    %cst_13 = arith.constant 2.000000e+00 : f32
    %43 = vector.broadcast %cst_13 : f32 to vector<8x32xf32>
    %44 = arith.mulf %43, %42 : vector<8x32xf32>
    %cst_14 = arith.constant 1.000000e+00 : f32
    %45 = vector.broadcast %cst_14 : f32 to vector<8x32xf32>
    %46 = arith.subf %44, %45 : vector<8x32xf32>
    %47 = vector.extract_strided_slice %39 {offsets = [0, 96], sizes = [8, 32], strides = [1, 1]} : vector<8x128xf32> to vector<8x32xf32>
    %48 = arith.mulf %41, %29 : vector<8x32xf32>
    %49 = arith.mulf %40, %46 : vector<8x32xf32>
    %50 = arith.addf %48, %49 : vector<8x32xf32>
    %51 = math.tanh %50 : vector<8x32xf32>
    %52 = arith.mulf %47, %51 : vector<8x32xf32>
    %53 = vector.extract_strided_slice %7 {offsets = [16, 0], sizes = [8, 128], strides = [1, 1]} : vector<64x128xf32> to vector<8x128xf32>
    %cst_15 = arith.constant dense<0.000000e+00> : vector<8x128xf32>
    %54 = tpu.matmul %52, %8, %cst_15 {dimension_numbers = #tpu.dot_dimension_numbers<[1], [0], [0], [1], [0, 0, 1, 1], [], []>} : vector<8x32xf32>, vector<32x128xf32>, vector<8x128xf32> -> vector<8x128xf32>
    %55 = arith.addf %53, %54 : vector<8x128xf32>
    %56 = arith.negf %55 : vector<8x128xf32>
    %57 = math.exp %56 : vector<8x128xf32>
    %cst_16 = arith.constant 1.000000e+00 : f32
    %58 = vector.broadcast %cst_16 : f32 to vector<8x128xf32>
    %59 = arith.addf %58, %57 : vector<8x128xf32>
    %60 = arith.divf %58, %59 : vector<8x128xf32>
    %61 = vector.extract_strided_slice %60 {offsets = [0, 0], sizes = [8, 32], strides = [1, 1]} : vector<8x128xf32> to vector<8x32xf32>
    %62 = vector.extract_strided_slice %60 {offsets = [0, 32], sizes = [8, 32], strides = [1, 1]} : vector<8x128xf32> to vector<8x32xf32>
    %63 = vector.extract_strided_slice %60 {offsets = [0, 64], sizes = [8, 32], strides = [1, 1]} : vector<8x128xf32> to vector<8x32xf32>
    %cst_17 = arith.constant 2.000000e+00 : f32
    %64 = vector.broadcast %cst_17 : f32 to vector<8x32xf32>
    %65 = arith.mulf %64, %63 : vector<8x32xf32>
    %cst_18 = arith.constant 1.000000e+00 : f32
    %66 = vector.broadcast %cst_18 : f32 to vector<8x32xf32>
    %67 = arith.subf %65, %66 : vector<8x32xf32>
    %68 = vector.extract_strided_slice %60 {offsets = [0, 96], sizes = [8, 32], strides = [1, 1]} : vector<8x128xf32> to vector<8x32xf32>
    %69 = arith.mulf %62, %50 : vector<8x32xf32>
    %70 = arith.mulf %61, %67 : vector<8x32xf32>
    %71 = arith.addf %69, %70 : vector<8x32xf32>
    %72 = math.tanh %71 : vector<8x32xf32>
    %73 = arith.mulf %68, %72 : vector<8x32xf32>
    %74 = vector.extract_strided_slice %7 {offsets = [24, 0], sizes = [8, 128], strides = [1, 1]} : vector<64x128xf32> to vector<8x128xf32>
    %cst_19 = arith.constant dense<0.000000e+00> : vector<8x128xf32>
    %75 = tpu.matmul %73, %8, %cst_19 {dimension_numbers = #tpu.dot_dimension_numbers<[1], [0], [0], [1], [0, 0, 1, 1], [], []>} : vector<8x32xf32>, vector<32x128xf32>, vector<8x128xf32> -> vector<8x128xf32>
    %76 = arith.addf %74, %75 : vector<8x128xf32>
    %77 = arith.negf %76 : vector<8x128xf32>
    %78 = math.exp %77 : vector<8x128xf32>
    %cst_20 = arith.constant 1.000000e+00 : f32
    %79 = vector.broadcast %cst_20 : f32 to vector<8x128xf32>
    %80 = arith.addf %79, %78 : vector<8x128xf32>
    %81 = arith.divf %79, %80 : vector<8x128xf32>
    %82 = vector.extract_strided_slice %81 {offsets = [0, 0], sizes = [8, 32], strides = [1, 1]} : vector<8x128xf32> to vector<8x32xf32>
    %83 = vector.extract_strided_slice %81 {offsets = [0, 32], sizes = [8, 32], strides = [1, 1]} : vector<8x128xf32> to vector<8x32xf32>
    %84 = vector.extract_strided_slice %81 {offsets = [0, 64], sizes = [8, 32], strides = [1, 1]} : vector<8x128xf32> to vector<8x32xf32>
    %cst_21 = arith.constant 2.000000e+00 : f32
    %85 = vector.broadcast %cst_21 : f32 to vector<8x32xf32>
    %86 = arith.mulf %85, %84 : vector<8x32xf32>
    %cst_22 = arith.constant 1.000000e+00 : f32
    %87 = vector.broadcast %cst_22 : f32 to vector<8x32xf32>
    %88 = arith.subf %86, %87 : vector<8x32xf32>
    %89 = vector.extract_strided_slice %81 {offsets = [0, 96], sizes = [8, 32], strides = [1, 1]} : vector<8x128xf32> to vector<8x32xf32>
    %90 = arith.mulf %83, %71 : vector<8x32xf32>
    %91 = arith.mulf %82, %88 : vector<8x32xf32>
    %92 = arith.addf %90, %91 : vector<8x32xf32>
    %93 = math.tanh %92 : vector<8x32xf32>
    %94 = arith.mulf %89, %93 : vector<8x32xf32>
    %95 = vector.extract_strided_slice %7 {offsets = [32, 0], sizes = [8, 128], strides = [1, 1]} : vector<64x128xf32> to vector<8x128xf32>
    %cst_23 = arith.constant dense<0.000000e+00> : vector<8x128xf32>
    %96 = tpu.matmul %94, %8, %cst_23 {dimension_numbers = #tpu.dot_dimension_numbers<[1], [0], [0], [1], [0, 0, 1, 1], [], []>} : vector<8x32xf32>, vector<32x128xf32>, vector<8x128xf32> -> vector<8x128xf32>
    %97 = arith.addf %95, %96 : vector<8x128xf32>
    %98 = arith.negf %97 : vector<8x128xf32>
    %99 = math.exp %98 : vector<8x128xf32>
    %cst_24 = arith.constant 1.000000e+00 : f32
    %100 = vector.broadcast %cst_24 : f32 to vector<8x128xf32>
    %101 = arith.addf %100, %99 : vector<8x128xf32>
    %102 = arith.divf %100, %101 : vector<8x128xf32>
    %103 = vector.extract_strided_slice %102 {offsets = [0, 0], sizes = [8, 32], strides = [1, 1]} : vector<8x128xf32> to vector<8x32xf32>
    %104 = vector.extract_strided_slice %102 {offsets = [0, 32], sizes = [8, 32], strides = [1, 1]} : vector<8x128xf32> to vector<8x32xf32>
    %105 = vector.extract_strided_slice %102 {offsets = [0, 64], sizes = [8, 32], strides = [1, 1]} : vector<8x128xf32> to vector<8x32xf32>
    %cst_25 = arith.constant 2.000000e+00 : f32
    %106 = vector.broadcast %cst_25 : f32 to vector<8x32xf32>
    %107 = arith.mulf %106, %105 : vector<8x32xf32>
    %cst_26 = arith.constant 1.000000e+00 : f32
    %108 = vector.broadcast %cst_26 : f32 to vector<8x32xf32>
    %109 = arith.subf %107, %108 : vector<8x32xf32>
    %110 = vector.extract_strided_slice %102 {offsets = [0, 96], sizes = [8, 32], strides = [1, 1]} : vector<8x128xf32> to vector<8x32xf32>
    %111 = arith.mulf %104, %92 : vector<8x32xf32>
    %112 = arith.mulf %103, %109 : vector<8x32xf32>
    %113 = arith.addf %111, %112 : vector<8x32xf32>
    %114 = math.tanh %113 : vector<8x32xf32>
    %115 = arith.mulf %110, %114 : vector<8x32xf32>
    %116 = vector.extract_strided_slice %7 {offsets = [40, 0], sizes = [8, 128], strides = [1, 1]} : vector<64x128xf32> to vector<8x128xf32>
    %cst_27 = arith.constant dense<0.000000e+00> : vector<8x128xf32>
    %117 = tpu.matmul %115, %8, %cst_27 {dimension_numbers = #tpu.dot_dimension_numbers<[1], [0], [0], [1], [0, 0, 1, 1], [], []>} : vector<8x32xf32>, vector<32x128xf32>, vector<8x128xf32> -> vector<8x128xf32>
    %118 = arith.addf %116, %117 : vector<8x128xf32>
    %119 = arith.negf %118 : vector<8x128xf32>
    %120 = math.exp %119 : vector<8x128xf32>
    %cst_28 = arith.constant 1.000000e+00 : f32
    %121 = vector.broadcast %cst_28 : f32 to vector<8x128xf32>
    %122 = arith.addf %121, %120 : vector<8x128xf32>
    %123 = arith.divf %121, %122 : vector<8x128xf32>
    %124 = vector.extract_strided_slice %123 {offsets = [0, 0], sizes = [8, 32], strides = [1, 1]} : vector<8x128xf32> to vector<8x32xf32>
    %125 = vector.extract_strided_slice %123 {offsets = [0, 32], sizes = [8, 32], strides = [1, 1]} : vector<8x128xf32> to vector<8x32xf32>
    %126 = vector.extract_strided_slice %123 {offsets = [0, 64], sizes = [8, 32], strides = [1, 1]} : vector<8x128xf32> to vector<8x32xf32>
    %cst_29 = arith.constant 2.000000e+00 : f32
    %127 = vector.broadcast %cst_29 : f32 to vector<8x32xf32>
    %128 = arith.mulf %127, %126 : vector<8x32xf32>
    %cst_30 = arith.constant 1.000000e+00 : f32
    %129 = vector.broadcast %cst_30 : f32 to vector<8x32xf32>
    %130 = arith.subf %128, %129 : vector<8x32xf32>
    %131 = vector.extract_strided_slice %123 {offsets = [0, 96], sizes = [8, 32], strides = [1, 1]} : vector<8x128xf32> to vector<8x32xf32>
    %132 = arith.mulf %125, %113 : vector<8x32xf32>
    %133 = arith.mulf %124, %130 : vector<8x32xf32>
    %134 = arith.addf %132, %133 : vector<8x32xf32>
    %135 = math.tanh %134 : vector<8x32xf32>
    %136 = arith.mulf %131, %135 : vector<8x32xf32>
    %137 = vector.extract_strided_slice %7 {offsets = [48, 0], sizes = [8, 128], strides = [1, 1]} : vector<64x128xf32> to vector<8x128xf32>
    %cst_31 = arith.constant dense<0.000000e+00> : vector<8x128xf32>
    %138 = tpu.matmul %136, %8, %cst_31 {dimension_numbers = #tpu.dot_dimension_numbers<[1], [0], [0], [1], [0, 0, 1, 1], [], []>} : vector<8x32xf32>, vector<32x128xf32>, vector<8x128xf32> -> vector<8x128xf32>
    %139 = arith.addf %137, %138 : vector<8x128xf32>
    %140 = arith.negf %139 : vector<8x128xf32>
    %141 = math.exp %140 : vector<8x128xf32>
    %cst_32 = arith.constant 1.000000e+00 : f32
    %142 = vector.broadcast %cst_32 : f32 to vector<8x128xf32>
    %143 = arith.addf %142, %141 : vector<8x128xf32>
    %144 = arith.divf %142, %143 : vector<8x128xf32>
    %145 = vector.extract_strided_slice %144 {offsets = [0, 0], sizes = [8, 32], strides = [1, 1]} : vector<8x128xf32> to vector<8x32xf32>
    %146 = vector.extract_strided_slice %144 {offsets = [0, 32], sizes = [8, 32], strides = [1, 1]} : vector<8x128xf32> to vector<8x32xf32>
    %147 = vector.extract_strided_slice %144 {offsets = [0, 64], sizes = [8, 32], strides = [1, 1]} : vector<8x128xf32> to vector<8x32xf32>
    %cst_33 = arith.constant 2.000000e+00 : f32
    %148 = vector.broadcast %cst_33 : f32 to vector<8x32xf32>
    %149 = arith.mulf %148, %147 : vector<8x32xf32>
    %cst_34 = arith.constant 1.000000e+00 : f32
    %150 = vector.broadcast %cst_34 : f32 to vector<8x32xf32>
    %151 = arith.subf %149, %150 : vector<8x32xf32>
    %152 = vector.extract_strided_slice %144 {offsets = [0, 96], sizes = [8, 32], strides = [1, 1]} : vector<8x128xf32> to vector<8x32xf32>
    %153 = arith.mulf %146, %134 : vector<8x32xf32>
    %154 = arith.mulf %145, %151 : vector<8x32xf32>
    %155 = arith.addf %153, %154 : vector<8x32xf32>
    %156 = math.tanh %155 : vector<8x32xf32>
    %157 = arith.mulf %152, %156 : vector<8x32xf32>
    %158 = vector.extract_strided_slice %7 {offsets = [56, 0], sizes = [8, 128], strides = [1, 1]} : vector<64x128xf32> to vector<8x128xf32>
    %cst_35 = arith.constant dense<0.000000e+00> : vector<8x128xf32>
    %159 = tpu.matmul %157, %8, %cst_35 {dimension_numbers = #tpu.dot_dimension_numbers<[1], [0], [0], [1], [0, 0, 1, 1], [], []>} : vector<8x32xf32>, vector<32x128xf32>, vector<8x128xf32> -> vector<8x128xf32>
    %160 = arith.addf %158, %159 : vector<8x128xf32>
    %161 = arith.negf %160 : vector<8x128xf32>
    %162 = math.exp %161 : vector<8x128xf32>
    %cst_36 = arith.constant 1.000000e+00 : f32
    %163 = vector.broadcast %cst_36 : f32 to vector<8x128xf32>
    %164 = arith.addf %163, %162 : vector<8x128xf32>
    %165 = arith.divf %163, %164 : vector<8x128xf32>
    %166 = vector.extract_strided_slice %165 {offsets = [0, 0], sizes = [8, 32], strides = [1, 1]} : vector<8x128xf32> to vector<8x32xf32>
    %167 = vector.extract_strided_slice %165 {offsets = [0, 32], sizes = [8, 32], strides = [1, 1]} : vector<8x128xf32> to vector<8x32xf32>
    %168 = vector.extract_strided_slice %165 {offsets = [0, 64], sizes = [8, 32], strides = [1, 1]} : vector<8x128xf32> to vector<8x32xf32>
    %cst_37 = arith.constant 2.000000e+00 : f32
    %169 = vector.broadcast %cst_37 : f32 to vector<8x32xf32>
    %170 = arith.mulf %169, %168 : vector<8x32xf32>
    %cst_38 = arith.constant 1.000000e+00 : f32
    %171 = vector.broadcast %cst_38 : f32 to vector<8x32xf32>
    %172 = arith.subf %170, %171 : vector<8x32xf32>
    %173 = vector.extract_strided_slice %165 {offsets = [0, 96], sizes = [8, 32], strides = [1, 1]} : vector<8x128xf32> to vector<8x32xf32>
    %174 = arith.mulf %167, %155 : vector<8x32xf32>
    %175 = arith.mulf %166, %172 : vector<8x32xf32>
    %176 = arith.addf %174, %175 : vector<8x32xf32>
    %177 = math.tanh %176 : vector<8x32xf32>
    %178 = arith.mulf %173, %177 : vector<8x32xf32>
    %c0_39 = arith.constant 0 : index
    %c0_40 = arith.constant 0 : index
    %179 = vector.load %arg3[%c0_39, %c0_40] : memref<32x128xf32, #tpu.memory_space<vmem>>, vector<32x128xf32>
    %cst_41 = arith.constant dense<0.000000e+00> : vector<8x128xf32>
    %180 = tpu.matmul %178, %179, %cst_41 {dimension_numbers = #tpu.dot_dimension_numbers<[1], [0], [0], [1], [0, 0, 1, 1], [], []>} : vector<8x32xf32>, vector<32x128xf32>, vector<8x128xf32> -> vector<8x128xf32>
    %c0_42 = arith.constant 0 : index
    %c0_43 = arith.constant 0 : index
    %181 = vector.load %arg4[%c0_42, %c0_43] : memref<1x128xf32, #tpu.memory_space<vmem>>, vector<1x128xf32>
    %182 = vector.broadcast %181 : vector<1x128xf32> to vector<8x128xf32>
    %183 = arith.addf %180, %182 : vector<8x128xf32>
    %184 = arith.negf %183 : vector<8x128xf32>
    %185 = math.exp %184 : vector<8x128xf32>
    %cst_44 = arith.constant 1.000000e+00 : f32
    %186 = vector.broadcast %cst_44 : f32 to vector<8x128xf32>
    %187 = arith.addf %186, %185 : vector<8x128xf32>
    %188 = arith.divf %186, %187 : vector<8x128xf32>
    %c0_45 = arith.constant 0 : index
    %c0_46 = arith.constant 0 : index
    %189 = vector.load %arg5[%c0_45, %c0_46] : memref<8x128xf32, #tpu.memory_space<vmem>>, vector<8x128xf32>
    tpu.vector_store %arg5[%c0_45, %c0_46], %188 {strides = array<i32>} : memref<8x128xf32, #tpu.memory_space<vmem>>, vector<8x128xf32>,
    return
  }
}

</mosaic_0001>

<llo_original>
// kernel: simple_lstm_forward.1
$region0: #{simple_lstm_forward.1}
  #allocation0 [shape = 'u32[]', space=smem, size = 0x4, offset = 0x4, fixed_abs, tag = 'smem constant byte address 0x4 - core index']
  #allocation1 [shape = 'u32[144,128]{1,0:T(1,128)}', space=vmem, size = 0x12000, scoped, tag = 'internal scratch']
  %s0 = inlined_call_operand.vmem [shape: s32[64,1], index: 0, kind: input, shape index: {}]
  %s1 = inlined_call_operand.hbm [shape: f32[128,128], index: 1, kind: input, shape index: {}]
  %s2 = inlined_call_operand.vmem [shape: f32[32,128], index: 2, kind: input, shape index: {}]
  %s3 = inlined_call_operand.vmem [shape: f32[32,128], index: 3, kind: input, shape index: {}]
  %s4 = inlined_call_operand.vmem [shape: f32[1,128], index: 4, kind: input, shape index: {}]
  %s5 = inlined_call_operand.hbm [shape: f32[8,128], index: 5, kind: output, shape index: {}]
  %s6 = sld [smem:[#allocation0]]
  $region34: #{simple_lstm_forward.1} parent=0
    _
  %s8 = ssub.s32 1, %s6
  %s9 = scalar_select 0, %s8, %s6
  $region1: #{simple_lstm_forward.1} parent=0
    #allocation2 [shape = 'u8[65536]{0}', space=vmem, size = 0x10000, scoped, tag = 'input window, operand 1, single buffered']
    #allocation3 [shape = 's32[1]{0}', space=sflag, size = 0x4, scoped, tag = 'scoped memory for simple_lstm_forward.1']
    #allocation4 [shape = 's32[1]{0}', space=sflag, size = 0x4, scoped, tag = 'scoped memory for simple_lstm_forward.1']
    #allocation5 [shape = 'u8[4096]{0}', space=vmem, size = 0x1000, scoped, tag = 'output window, operand 0, single buffered']
    %10 = vsyncpa [#allocation3], 0
    %11 = vsyncpa [#allocation4], 0
    // Predicated region
    $region2: #{simple_lstm_forward.1} parent=1 // pred_check
      _
    $region3: #{simple_lstm_forward.1} parent=1 // pred_check_branch
      %13 = sbr.rel (0) target = $region5
    $region4: #{simple_lstm_forward.1} parent=1 // pred_region
      _
    $region5: #{simple_lstm_forward.1} parent=1 // pred_fallthru
      _
    // Predicated region
    $region6: #{simple_lstm_forward.1} parent=1 // pred_check
      _
    $region7: #{simple_lstm_forward.1} parent=1 // pred_check_branch
      %15 = sbr.rel (0) target = $region9
    $region8: #{simple_lstm_forward.1} parent=1 // pred_region
      %s17 = ssub.s32 2048, 2048
      %18 = vsyncadd [#allocation3], %s17
      %s19 = sshll.u32 [#allocation2], 4
      %s20 = int_to_ptr.vmem [resolvable:$true] %s19
      %25 = dma.hbm_to_vmem [thread:$0]  %s1, 2048, %s20, [#allocation3], 128, 128, 8
    $region9: #{simple_lstm_forward.1} parent=1 // pred_fallthru
      _
    // Predicated region
    $region10: #{simple_lstm_forward.1} parent=1 // pred_check
      _
    $region11: #{simple_lstm_forward.1} parent=1 // pred_check_branch
      %27 = sbr.rel (0) target = $region13
    $region12: #{simple_lstm_forward.1} parent=1 // pred_region
      _
    $region13: #{simple_lstm_forward.1} parent=1 // pred_fallthru
      _
    // Predicated region
    $region14: #{simple_lstm_forward.1} parent=1 // pred_check
      _
    $region15: #{simple_lstm_forward.1} parent=1 // pred_check_branch
      %29 = sbr.rel (0) target = $region17
    $region16: #{simple_lstm_forward.1} parent=1 // pred_region
      _
    $region17: #{simple_lstm_forward.1} parent=1 // pred_fallthru
      _
    // Predicated region
    $region18: #{simple_lstm_forward.1} parent=1 // pred_check
      _
    $region19: #{simple_lstm_forward.1} parent=1 // pred_check_branch
      %31 = sbr.rel (0) target = $region21
    $region20: #{simple_lstm_forward.1} parent=1 // pred_region
      _
    $region21: #{simple_lstm_forward.1} parent=1 // pred_fallthru
      _
    // Predicated region
    $region22: #{simple_lstm_forward.1} parent=1 // pred_check
      _
    $region23: #{simple_lstm_forward.1} parent=1 // pred_check_branch
      %33 = sbr.rel (0) target = $region25
    $region24: #{simple_lstm_forward.1} parent=1 // pred_region
      %34 = dma.done [#allocation3], 2048
    $region25: #{simple_lstm_forward.1} parent=1 // pred_fallthru
      _
    %v35 = vld [vmem:[%s0] sm:$0xff]
    %v36 = vld [vmem:[%s0 + $0x8] sm:$0xff]
    %v37 = vld [vmem:[%s0 + $0x10] sm:$0xff]
    %v38 = vld [vmem:[%s0 + $0x18] sm:$0xff]
    %v39 = vld [vmem:[%s0 + $0x20] sm:$0xff]
    %v40 = vld [vmem:[%s0 + $0x28] sm:$0xff]
    %v41 = vld [vmem:[%s0 + $0x30] sm:$0xff]
    %v42 = vld [vmem:[%s0 + $0x38] sm:$0xff]
    %v43 = vlaneseq
    %v44 = vand.u32 %v43, 127
    %45 = vset.pattern.permute.xlu0 0
    %46 = vperm.xlu0 %45, %v35
    %v47 = vpop.permute.xlu0 %46
    %48 = vset.pattern.permute.xlu0 0
    %49 = vperm.xlu0 %48, %v36
    %v50 = vpop.permute.xlu0 %49
    %51 = vset.pattern.permute.xlu0 0
    %52 = vperm.xlu0 %51, %v37
    %v53 = vpop.permute.xlu0 %52
    %54 = vset.pattern.permute.xlu0 0
    %55 = vperm.xlu0 %54, %v38
    %v56 = vpop.permute.xlu0 %55
    %57 = vset.pattern.permute.xlu0 0
    %58 = vperm.xlu0 %57, %v39
    %v59 = vpop.permute.xlu0 %58
    %60 = vset.pattern.permute.xlu0 0
    %61 = vperm.xlu0 %60, %v40
    %v62 = vpop.permute.xlu0 %61
    %63 = vset.pattern.permute.xlu0 0
    %64 = vperm.xlu0 %63, %v41
    %v65 = vpop.permute.xlu0 %64
    %66 = vset.pattern.permute.xlu0 0
    %67 = vperm.xlu0 %66, %v42
    %v68 = vpop.permute.xlu0 %67
    %vm69 = vcmp.eq.s32.totalorder %v47, %v44
    %vm70 = vcmp.eq.s32.totalorder %v50, %v44
    %vm71 = vcmp.eq.s32.totalorder %v53, %v44
    %vm72 = vcmp.eq.s32.totalorder %v56, %v44
    %vm73 = vcmp.eq.s32.totalorder %v59, %v44
    %vm74 = vcmp.eq.s32.totalorder %v62, %v44
    %vm75 = vcmp.eq.s32.totalorder %v65, %v44
    %vm76 = vcmp.eq.s32.totalorder %v68, %v44
    %v77 = vsel %vm69, 1, 0
    %v78 = vsel %vm70, 1, 0
    %v79 = vsel %vm71, 1, 0
    %v80 = vsel %vm72, 1, 0
    %v81 = vsel %vm73, 1, 0
    %v82 = vsel %vm74, 1, 0
    %v83 = vsel %vm75, 1, 0
    %v84 = vsel %vm76, 1, 0
    %v85 = vcvt.s32.f32 %v77
    %v86 = vcvt.s32.f32 %v78
    %v87 = vcvt.s32.f32 %v79
    %v88 = vcvt.s32.f32 %v80
    %v89 = vcvt.s32.f32 %v81
    %v90 = vcvt.s32.f32 %v82
    %v91 = vcvt.s32.f32 %v83
    %v92 = vcvt.s32.f32 %v84
    %v93 = vld [vmem:[#allocation2] sm:$0xff]
    %v94 = vld [vmem:[#allocation2 + $0x8] sm:$0xff]
    %v95 = vld [vmem:[#allocation2 + $0x10] sm:$0xff]
    %v96 = vld [vmem:[#allocation2 + $0x18] sm:$0xff]
    %v97 = vld [vmem:[#allocation2 + $0x20] sm:$0xff]
    %v98 = vld [vmem:[#allocation2 + $0x28] sm:$0xff]
    %v99 = vld [vmem:[#allocation2 + $0x30] sm:$0xff]
    %v100 = vld [vmem:[#allocation2 + $0x38] sm:$0xff]
    %v101 = vld [vmem:[#allocation2 + $0x40] sm:$0xff]
    %v102 = vld [vmem:[#allocation2 + $0x48] sm:$0xff]
    %v103 = vld [vmem:[#allocation2 + $0x50] sm:$0xff]
    %v104 = vld [vmem:[#allocation2 + $0x58] sm:$0xff]
    %v105 = vld [vmem:[#allocation2 + $0x60] sm:$0xff]
    %v106 = vld [vmem:[#allocation2 + $0x68] sm:$0xff]
    %v107 = vld [vmem:[#allocation2 + $0x70] sm:$0xff]
    %v108 = vld [vmem:[#allocation2 + $0x78] sm:$0xff]
    %109 = vmatprep.subr.mxu0 0.0
    %110 = vmatpush1.msra.mxu0 %v93
    %111 = vmatprep.subr.mxu0 0.0
    %112 = vmatpush1.msra.mxu0 %v94
    %113 = vmatprep.subr.mxu0 0.0
    %114 = vmatpush1.msra.mxu0 %v95
    %115 = vmatprep.subr.mxu0 0.0
    %116 = vmatpush1.msra.mxu0 %v96
    %117 = vmatprep.subr.mxu0 0.0
    %118 = vmatpush1.msra.mxu0 %v97
    %119 = vmatprep.subr.mxu0 0.0
    %120 = vmatpush1.msra.mxu0 %v98
    %121 = vmatprep.subr.mxu0 0.0
    %122 = vmatpush1.msra.mxu0 %v99
    %123 = vmatprep.subr.mxu0 0.0
    %124 = vmatpush1.msra.mxu0 %v100
    %125 = vmatprep.subr.mxu0 0.0
    %126 = vmatpush1.msra.mxu0 %v101
    %127 = vmatprep.subr.mxu0 0.0
    %128 = vmatpush1.msra.mxu0 %v102
    %129 = vmatprep.subr.mxu0 0.0
    %130 = vmatpush1.msra.mxu0 %v103
    %131 = vmatprep.subr.mxu0 0.0
    %132 = vmatpush1.msra.mxu0 %v104
    %133 = vmatprep.subr.mxu0 0.0
    %134 = vmatpush1.msra.mxu0 %v105
    %135 = vmatprep.subr.mxu0 0.0
    %136 = vmatpush1.msra.mxu0 %v106
    %137 = vmatprep.subr.mxu0 0.0
    %138 = vmatpush1.msra.mxu0 %v107
    %139 = vmatprep.subr.mxu0 0.0
    %140 = vmatpush1.msra.mxu0 %v108
    %141 = vmatprep.subr.mxu0 0.0
    %142 = vmatpush1.msra.mxu0 0.0
    %143 = vmatprep.subr.mxu0 0.0
    %144 = vmatpush1.msra.mxu0 0.0
    %145 = vmatprep.subr.mxu0 0.0
    %146 = vmatpush1.msra.mxu0 0.0
    %147 = vmatprep.subr.mxu0 0.0
    %148 = vmatpush1.msra.mxu0 0.0
    %149 = vmatprep.subr.mxu0 0.0
    %150 = vmatpush1.msra.mxu0 0.0
    %151 = vmatprep.subr.mxu0 0.0
    %152 = vmatpush1.msra.mxu0 0.0
    %153 = vmatprep.subr.mxu0 0.0
    %154 = vmatpush1.msra.mxu0 0.0
    %155 = vmatprep.subr.mxu0 0.0
    %156 = vmatpush1.msra.mxu0 0.0
    %157 = vmatprep.subr.mxu0 0.0
    %158 = vmatpush1.msra.mxu0 0.0
    %159 = vmatprep.subr.mxu0 0.0
    %160 = vmatpush1.msra.mxu0 0.0
    %161 = vmatprep.subr.mxu0 0.0
    %162 = vmatpush1.msra.mxu0 0.0
    %163 = vmatprep.subr.mxu0 0.0
    %164 = vmatpush1.msra.mxu0 0.0
    %165 = vmatprep.subr.mxu0 0.0
    %166 = vmatpush1.msra.mxu0 0.0
    %167 = vmatprep.subr.mxu0 0.0
    %168 = vmatpush1.msra.mxu0 0.0
    %169 = vmatprep.subr.mxu0 0.0
    %170 = vmatpush1.msra.mxu0 0.0
    %171 = vmatprep.subr.mxu0 0.0
    %172 = vmatpush1.msra.mxu0 0.0
    %173 = vmatprep.mubr.f32.mxu0 0.0
    %174 = vmatmul.mubr.f32.gmra.mrb[0].mxu0 %v85
    %v175 = vpop.f32.mrb[0].mxu0
    %v176 = vadd.f32 0.0, %v175
    %v177 = vpop.f32.mrb[0].mxu0
    %178 = vmatprep.mubr.f32.mxu0 0.0
    %179 = vmatmul.mubr.f32.gmra.mrb[0].mxu0 %v86
    %v180 = vpop.f32.mrb[0].mxu0
    %v181 = vadd.f32 0.0, %v180
    %v182 = vpop.f32.mrb[0].mxu0
    %183 = vmatprep.mubr.f32.mxu0 0.0
    %184 = vmatmul.mubr.f32.gmra.mrb[0].mxu0 %v87
    %v185 = vpop.f32.mrb[0].mxu0
    %v186 = vadd.f32 0.0, %v185
    %v187 = vpop.f32.mrb[0].mxu0
    %188 = vmatprep.mubr.f32.mxu0 0.0
    %189 = vmatmul.mubr.f32.gmra.mrb[0].mxu0 %v88
    %v190 = vpop.f32.mrb[0].mxu0
    %v191 = vadd.f32 0.0, %v190
    %v192 = vpop.f32.mrb[0].mxu0
    %193 = vmatprep.mubr.f32.mxu0 0.0
    %194 = vmatmul.mubr.f32.gmra.mrb[0].mxu0 %v89
    %v195 = vpop.f32.mrb[0].mxu0
    %v196 = vadd.f32 0.0, %v195
    %v197 = vpop.f32.mrb[0].mxu0
    %198 = vmatprep.mubr.f32.mxu0 0.0
    %199 = vmatmul.mubr.f32.gmra.mrb[0].mxu0 %v90
    %v200 = vpop.f32.mrb[0].mxu0
    %v201 = vadd.f32 0.0, %v200
    %v202 = vpop.f32.mrb[0].mxu0
    %203 = vmatprep.mubr.f32.mxu0 0.0
    %204 = vmatmul.mubr.f32.gmra.mrb[0].mxu0 %v91
    %v205 = vpop.f32.mrb[0].mxu0
    %v206 = vadd.f32 0.0, %v205
    %v207 = vpop.f32.mrb[0].mxu0
    %208 = vmatprep.mubr.f32.mxu0 0.0
    %209 = vmatmul.mubr.f32.gmra.mrb[0].mxu0 %v92
    %v210 = vpop.f32.mrb[0].mxu0
    %v211 = vadd.f32 0.0, %v210
    %v212 = vpop.f32.mrb[0].mxu0
    %213 = vdwg.mxu0
    %v214 = vld [vmem:[%s2] sm:$0xff]
    %v215 = vld [vmem:[%s2 + $0x8] sm:$0xff]
    %v216 = vld [vmem:[%s2 + $0x10] sm:$0xff]
    %v217 = vld [vmem:[%s2 + $0x18] sm:$0xff]
    %vm218 = vcmask 261120
    %v220 = vsel %vm218, 0.0, 0
    %222 = vmatprep.subr.mxu0 0.0
    %223 = vmatpush1.msra.mxu0 %v214
    %224 = vmatprep.subr.mxu0 0.0
    %225 = vmatpush1.msra.mxu0 %v215
    %226 = vmatprep.subr.mxu0 0.0
    %227 = vmatpush1.msra.mxu0 %v216
    %228 = vmatprep.subr.mxu0 0.0
    %229 = vmatpush1.msra.mxu0 %v217
    %230 = vmatprep.subr.mxu0 0.0
    %231 = vmatpush1.msra.mxu0 0.0
    %232 = vmatprep.subr.mxu0 0.0
    %233 = vmatpush1.msra.mxu0 0.0
    %234 = vmatprep.subr.mxu0 0.0
    %235 = vmatpush1.msra.mxu0 0.0
    %236 = vmatprep.subr.mxu0 0.0
    %237 = vmatpush1.msra.mxu0 0.0
    %238 = vmatprep.subr.mxu0 0.0
    %239 = vmatpush1.msra.mxu0 0.0
    %240 = vmatprep.subr.mxu0 0.0
    %241 = vmatpush1.msra.mxu0 0.0
    %242 = vmatprep.subr.mxu0 0.0
    %243 = vmatpush1.msra.mxu0 0.0
    %244 = vmatprep.subr.mxu0 0.0
    %245 = vmatpush1.msra.mxu0 0.0
    %246 = vmatprep.subr.mxu0 0.0
    %247 = vmatpush1.msra.mxu0 0.0
    %248 = vmatprep.subr.mxu0 0.0
    %249 = vmatpush1.msra.mxu0 0.0
    %250 = vmatprep.subr.mxu0 0.0
    %251 = vmatpush1.msra.mxu0 0.0
    %252 = vmatprep.subr.mxu0 0.0
    %253 = vmatpush1.msra.mxu0 0.0
    %254 = vmatprep.subr.mxu0 0.0
    %255 = vmatpush1.msra.mxu0 0.0
    %256 = vmatprep.subr.mxu0 0.0
    %257 = vmatpush1.msra.mxu0 0.0
    %258 = vmatprep.subr.mxu0 0.0
    %259 = vmatpush1.msra.mxu0 0.0
    %260 = vmatprep.subr.mxu0 0.0
    %261 = vmatpush1.msra.mxu0 0.0
    %262 = vmatprep.subr.mxu0 0.0
    %263 = vmatpush1.msra.mxu0 0.0
    %264 = vmatprep.subr.mxu0 0.0
    %265 = vmatpush1.msra.mxu0 0.0
    %266 = vmatprep.subr.mxu0 0.0
    %267 = vmatpush1.msra.mxu0 0.0
    %268 = vmatprep.subr.mxu0 0.0
    %269 = vmatpush1.msra.mxu0 0.0
    %270 = vmatprep.subr.mxu0 0.0
    %271 = vmatpush1.msra.mxu0 0.0
    %272 = vmatprep.subr.mxu0 0.0
    %273 = vmatpush1.msra.mxu0 0.0
    %274 = vmatprep.subr.mxu0 0.0
    %275 = vmatpush1.msra.mxu0 0.0
    %276 = vmatprep.subr.mxu0 0.0
    %277 = vmatpush1.msra.mxu0 0.0
    %278 = vmatprep.subr.mxu0 0.0
    %279 = vmatpush1.msra.mxu0 0.0
    %280 = vmatprep.subr.mxu0 0.0
    %281 = vmatpush1.msra.mxu0 0.0
    %282 = vmatprep.subr.mxu0 0.0
    %283 = vmatpush1.msra.mxu0 0.0
    %284 = vmatprep.subr.mxu0 0.0
    %285 = vmatpush1.msra.mxu0 0.0
    %286 = vmatprep.mubr.f32.mxu0 0.0
    %287 = vmatmul.mubr.f32.gmra.mrb[0].mxu0 %v220
    %v288 = vpop.f32.mrb[0].mxu0
    %v289 = vadd.f32 0.0, %v288
    %v290 = vpop.f32.mrb[0].mxu0
    %291 = vdwg.mxu0
    %v292 = vadd.f32 %v176, %v289
    %v293 = vxor.u32 %v292, 2147483648
    %v294 = vmul.f32 %v293, 1.442695
    %v295 = vpow.pop %v294
    %v296 = vadd.f32 %v295, 1.0
    %v297 = vrcp.pop %v296
    %v298 = vmul.f32 1.0, %v297
    %v299 = vmul.f32 %v298, 2.0
    %v300 = vsub.f32 %v299, 1.0
    %v301 = vmul.f32 %v298, 0.0
    %303 = vrot.lane.b32.xlu0 %v300, 64
    %v304 = vpop.permute.xlu0 %303
    %v306 = vmul.f32 %v298, %v304
    %308 = vrot.lane.b32.xlu0 %v306, 32
    %v309 = vpop.permute.xlu0 %308
    %v311 = vadd.f32 %v301, %v309
    %v312 = vtanh.pop %v311
    %314 = vrot.lane.b32.xlu0 %v312, 64
    %v315 = vpop.permute.xlu0 %314
    %v317 = vmul.f32 %v298, %v315
    %319 = vrot.lane.b32.xlu0 %v317, 32
    %v320 = vpop.permute.xlu0 %319
    %v321 = vsel %vm218, %v320, 0
    %323 = vmatprep.subr.mxu0 0.0
    %324 = vmatpush1.msra.mxu0 %v214
    %325 = vmatprep.subr.mxu0 0.0
    %326 = vmatpush1.msra.mxu0 %v215
    %327 = vmatprep.subr.mxu0 0.0
    %328 = vmatpush1.msra.mxu0 %v216
    %329 = vmatprep.subr.mxu0 0.0
    %330 = vmatpush1.msra.mxu0 %v217
    %331 = vmatprep.subr.mxu0 0.0
    %332 = vmatpush1.msra.mxu0 0.0
    %333 = vmatprep.subr.mxu0 0.0
    %334 = vmatpush1.msra.mxu0 0.0
    %335 = vmatprep.subr.mxu0 0.0
    %336 = vmatpush1.msra.mxu0 0.0
    %337 = vmatprep.subr.mxu0 0.0
    %338 = vmatpush1.msra.mxu0 0.0
    %339 = vmatprep.subr.mxu0 0.0
    %340 = vmatpush1.msra.mxu0 0.0
    %341 = vmatprep.subr.mxu0 0.0
    %342 = vmatpush1.msra.mxu0 0.0
    %343 = vmatprep.subr.mxu0 0.0
    %344 = vmatpush1.msra.mxu0 0.0
    %345 = vmatprep.subr.mxu0 0.0
    %346 = vmatpush1.msra.mxu0 0.0
    %347 = vmatprep.subr.mxu0 0.0
    %348 = vmatpush1.msra.mxu0 0.0
    %349 = vmatprep.subr.mxu0 0.0
    %350 = vmatpush1.msra.mxu0 0.0
    %351 = vmatprep.subr.mxu0 0.0
    %352 = vmatpush1.msra.mxu0 0.0
    %353 = vmatprep.subr.mxu0 0.0
    %354 = vmatpush1.msra.mxu0 0.0
    %355 = vmatprep.subr.mxu0 0.0
    %356 = vmatpush1.msra.mxu0 0.0
    %357 = vmatprep.subr.mxu0 0.0
    %358 = vmatpush1.msra.mxu0 0.0
    %359 = vmatprep.subr.mxu0 0.0
    %360 = vmatpush1.msra.mxu0 0.0
    %361 = vmatprep.subr.mxu0 0.0
    %362 = vmatpush1.msra.mxu0 0.0
    %363 = vmatprep.subr.mxu0 0.0
    %364 = vmatpush1.msra.mxu0 0.0
    %365 = vmatprep.subr.mxu0 0.0
    %366 = vmatpush1.msra.mxu0 0.0
    %367 = vmatprep.subr.mxu0 0.0
    %368 = vmatpush1.msra.mxu0 0.0
    %369 = vmatprep.subr.mxu0 0.0
    %370 = vmatpush1.msra.mxu0 0.0
    %371 = vmatprep.subr.mxu0 0.0
    %372 = vmatpush1.msra.mxu0 0.0
    %373 = vmatprep.subr.mxu0 0.0
    %374 = vmatpush1.msra.mxu0 0.0
    %375 = vmatprep.subr.mxu0 0.0
    %376 = vmatpush1.msra.mxu0 0.0
    %377 = vmatprep.subr.mxu0 0.0
    %378 = vmatpush1.msra.mxu0 0.0
    %379 = vmatprep.subr.mxu0 0.0
    %380 = vmatpush1.msra.mxu0 0.0
    %381 = vmatprep.subr.mxu0 0.0
    %382 = vmatpush1.msra.mxu0 0.0
    %383 = vmatprep.subr.mxu0 0.0
    %384 = vmatpush1.msra.mxu0 0.0
    %385 = vmatprep.subr.mxu0 0.0
    %386 = vmatpush1.msra.mxu0 0.0
    %387 = vmatprep.mubr.f32.mxu0 0.0
    %388 = vmatmul.mubr.f32.gmra.mrb[0].mxu0 %v321
    %v389 = vpop.f32.mrb[0].mxu0
    %v390 = vadd.f32 0.0, %v389
    %v391 = vpop.f32.mrb[0].mxu0
    %392 = vdwg.mxu0
    %v393 = vadd.f32 %v181, %v390
    %v394 = vxor.u32 %v393, 2147483648
    %v395 = vmul.f32 %v394, 1.442695
    %v396 = vpow.pop %v395
    %v397 = vadd.f32 %v396, 1.0
    %v398 = vrcp.pop %v397
    %v399 = vmul.f32 1.0, %v398
    %v400 = vmul.f32 %v399, 2.0
    %v401 = vsub.f32 %v400, 1.0
    %v402 = vmul.f32 %v399, %v311
    %404 = vrot.lane.b32.xlu0 %v401, 64
    %v405 = vpop.permute.xlu0 %404
    %v407 = vmul.f32 %v399, %v405
    %409 = vrot.lane.b32.xlu0 %v407, 32
    %v410 = vpop.permute.xlu0 %409
    %v412 = vadd.f32 %v402, %v410
    %v413 = vtanh.pop %v412
    %415 = vrot.lane.b32.xlu0 %v413, 64
    %v416 = vpop.permute.xlu0 %415
    %v418 = vmul.f32 %v399, %v416
    %420 = vrot.lane.b32.xlu0 %v418, 32
    %v421 = vpop.permute.xlu0 %420
    %v422 = vsel %vm218, %v421, 0
    %424 = vmatprep.subr.mxu0 0.0
    %425 = vmatpush1.msra.mxu0 %v214
    %426 = vmatprep.subr.mxu0 0.0
    %427 = vmatpush1.msra.mxu0 %v215
    %428 = vmatprep.subr.mxu0 0.0
    %429 = vmatpush1.msra.mxu0 %v216
    %430 = vmatprep.subr.mxu0 0.0
    %431 = vmatpush1.msra.mxu0 %v217
    %432 = vmatprep.subr.mxu0 0.0
    %433 = vmatpush1.msra.mxu0 0.0
    %434 = vmatprep.subr.mxu0 0.0
    %435 = vmatpush1.msra.mxu0 0.0
    %436 = vmatprep.subr.mxu0 0.0
    %437 = vmatpush1.msra.mxu0 0.0
    %438 = vmatprep.subr.mxu0 0.0
    %439 = vmatpush1.msra.mxu0 0.0
    %440 = vmatprep.subr.mxu0 0.0
    %441 = vmatpush1.msra.mxu0 0.0
    %442 = vmatprep.subr.mxu0 0.0
    %443 = vmatpush1.msra.mxu0 0.0
    %444 = vmatprep.subr.mxu0 0.0
    %445 = vmatpush1.msra.mxu0 0.0
    %446 = vmatprep.subr.mxu0 0.0
    %447 = vmatpush1.msra.mxu0 0.0
    %448 = vmatprep.subr.mxu0 0.0
    %449 = vmatpush1.msra.mxu0 0.0
    %450 = vmatprep.subr.mxu0 0.0
    %451 = vmatpush1.msra.mxu0 0.0
    %452 = vmatprep.subr.mxu0 0.0
    %453 = vmatpush1.msra.mxu0 0.0
    %454 = vmatprep.subr.mxu0 0.0
    %455 = vmatpush1.msra.mxu0 0.0
    %456 = vmatprep.subr.mxu0 0.0
    %457 = vmatpush1.msra.mxu0 0.0
    %458 = vmatprep.subr.mxu0 0.0
    %459 = vmatpush1.msra.mxu0 0.0
    %460 = vmatprep.subr.mxu0 0.0
    %461 = vmatpush1.msra.mxu0 0.0
    %462 = vmatprep.subr.mxu0 0.0
    %463 = vmatpush1.msra.mxu0 0.0
    %464 = vmatprep.subr.mxu0 0.0
    %465 = vmatpush1.msra.mxu0 0.0
    %466 = vmatprep.subr.mxu0 0.0
    %467 = vmatpush1.msra.mxu0 0.0
    %468 = vmatprep.subr.mxu0 0.0
    %469 = vmatpush1.msra.mxu0 0.0
    %470 = vmatprep.subr.mxu0 0.0
    %471 = vmatpush1.msra.mxu0 0.0
    %472 = vmatprep.subr.mxu0 0.0
    %473 = vmatpush1.msra.mxu0 0.0
    %474 = vmatprep.subr.mxu0 0.0
    %475 = vmatpush1.msra.mxu0 0.0
    %476 = vmatprep.subr.mxu0 0.0
    %477 = vmatpush1.msra.mxu0 0.0
    %478 = vmatprep.subr.mxu0 0.0
    %479 = vmatpush1.msra.mxu0 0.0
    %480 = vmatprep.subr.mxu0 0.0
    %481 = vmatpush1.msra.mxu0 0.0
    %482 = vmatprep.subr.mxu0 0.0
    %483 = vmatpush1.msra.mxu0 0.0
    %484 = vmatprep.subr.mxu0 0.0
    %485 = vmatpush1.msra.mxu0 0.0
    %486 = vmatprep.subr.mxu0 0.0
    %487 = vmatpush1.msra.mxu0 0.0
    %488 = vmatprep.mubr.f32.mxu0 0.0
    %489 = vmatmul.mubr.f32.gmra.mrb[0].mxu0 %v422
    %v490 = vpop.f32.mrb[0].mxu0
    %v491 = vadd.f32 0.0, %v490
    %v492 = vpop.f32.mrb[0].mxu0
    %493 = vdwg.mxu0
    %v494 = vadd.f32 %v186, %v491
    %v495 = vxor.u32 %v494, 2147483648
    %v496 = vmul.f32 %v495, 1.442695
    %v497 = vpow.pop %v496
    %v498 = vadd.f32 %v497, 1.0
    %v499 = vrcp.pop %v498
    %v500 = vmul.f32 1.0, %v499
    %v501 = vmul.f32 %v500, 2.0
    %v502 = vsub.f32 %v501, 1.0
    %v503 = vmul.f32 %v500, %v412
    %505 = vrot.lane.b32.xlu0 %v502, 64
    %v506 = vpop.permute.xlu0 %505
    %v508 = vmul.f32 %v500, %v506
    %510 = vrot.lane.b32.xlu0 %v508, 32
    %v511 = vpop.permute.xlu0 %510
    %v513 = vadd.f32 %v503, %v511
    %v514 = vtanh.pop %v513
    %516 = vrot.lane.b32.xlu0 %v514, 64
    %v517 = vpop.permute.xlu0 %516
    %v519 = vmul.f32 %v500, %v517
    %521 = vrot.lane.b32.xlu0 %v519, 32
    %v522 = vpop.permute.xlu0 %521
    %v523 = vsel %vm218, %v522, 0
    %525 = vmatprep.subr.mxu0 0.0
    %526 = vmatpush1.msra.mxu0 %v214
    %527 = vmatprep.subr.mxu0 0.0
    %528 = vmatpush1.msra.mxu0 %v215
    %529 = vmatprep.subr.mxu0 0.0
    %530 = vmatpush1.msra.mxu0 %v216
    %531 = vmatprep.subr.mxu0 0.0
    %532 = vmatpush1.msra.mxu0 %v217
    %533 = vmatprep.subr.mxu0 0.0
    %534 = vmatpush1.msra.mxu0 0.0
    %535 = vmatprep.subr.mxu0 0.0
    %536 = vmatpush1.msra.mxu0 0.0
    %537 = vmatprep.subr.mxu0 0.0
    %538 = vmatpush1.msra.mxu0 0.0
    %539 = vmatprep.subr.mxu0 0.0
    %540 = vmatpush1.msra.mxu0 0.0
    %541 = vmatprep.subr.mxu0 0.0
    %542 = vmatpush1.msra.mxu0 0.0
    %543 = vmatprep.subr.mxu0 0.0
    %544 = vmatpush1.msra.mxu0 0.0
    %545 = vmatprep.subr.mxu0 0.0
    %546 = vmatpush1.msra.mxu0 0.0
    %547 = vmatprep.subr.mxu0 0.0
    %548 = vmatpush1.msra.mxu0 0.0
    %549 = vmatprep.subr.mxu0 0.0
    %550 = vmatpush1.msra.mxu0 0.0
    %551 = vmatprep.subr.mxu0 0.0
    %552 = vmatpush1.msra.mxu0 0.0
    %553 = vmatprep.subr.mxu0 0.0
    %554 = vmatpush1.msra.mxu0 0.0
    %555 = vmatprep.subr.mxu0 0.0
    %556 = vmatpush1.msra.mxu0 0.0
    %557 = vmatprep.subr.mxu0 0.0
    %558 = vmatpush1.msra.mxu0 0.0
    %559 = vmatprep.subr.mxu0 0.0
    %560 = vmatpush1.msra.mxu0 0.0
    %561 = vmatprep.subr.mxu0 0.0
    %562 = vmatpush1.msra.mxu0 0.0
    %563 = vmatprep.subr.mxu0 0.0
    %564 = vmatpush1.msra.mxu0 0.0
    %565 = vmatprep.subr.mxu0 0.0
    %566 = vmatpush1.msra.mxu0 0.0
    %567 = vmatprep.subr.mxu0 0.0
    %568 = vmatpush1.msra.mxu0 0.0
    %569 = vmatprep.subr.mxu0 0.0
    %570 = vmatpush1.msra.mxu0 0.0
    %571 = vmatprep.subr.mxu0 0.0
    %572 = vmatpush1.msra.mxu0 0.0
    %573 = vmatprep.subr.mxu0 0.0
    %574 = vmatpush1.msra.mxu0 0.0
    %575 = vmatprep.subr.mxu0 0.0
    %576 = vmatpush1.msra.mxu0 0.0
    %577 = vmatprep.subr.mxu0 0.0
    %578 = vmatpush1.msra.mxu0 0.0
    %579 = vmatprep.subr.mxu0 0.0
    %580 = vmatpush1.msra.mxu0 0.0
    %581 = vmatprep.subr.mxu0 0.0
    %582 = vmatpush1.msra.mxu0 0.0
    %583 = vmatprep.subr.mxu0 0.0
    %584 = vmatpush1.msra.mxu0 0.0
    %585 = vmatprep.subr.mxu0 0.0
    %586 = vmatpush1.msra.mxu0 0.0
    %587 = vmatprep.subr.mxu0 0.0
    %588 = vmatpush1.msra.mxu0 0.0
    %589 = vmatprep.mubr.f32.mxu0 0.0
    %590 = vmatmul.mubr.f32.gmra.mrb[0].mxu0 %v523
    %v591 = vpop.f32.mrb[0].mxu0
    %v592 = vadd.f32 0.0, %v591
    %v593 = vpop.f32.mrb[0].mxu0
    %594 = vdwg.mxu0
    %v595 = vadd.f32 %v191, %v592
    %v596 = vxor.u32 %v595, 2147483648
    %v597 = vmul.f32 %v596, 1.442695
    %v598 = vpow.pop %v597
    %v599 = vadd.f32 %v598, 1.0
    %v600 = vrcp.pop %v599
    %v601 = vmul.f32 1.0, %v600
    %v602 = vmul.f32 %v601, 2.0
    %v603 = vsub.f32 %v602, 1.0
    %v604 = vmul.f32 %v601, %v513
    %606 = vrot.lane.b32.xlu0 %v603, 64
    %v607 = vpop.permute.xlu0 %606
    %v609 = vmul.f32 %v601, %v607
    %611 = vrot.lane.b32.xlu0 %v609, 32
    %v612 = vpop.permute.xlu0 %611
    %v614 = vadd.f32 %v604, %v612
    %v615 = vtanh.pop %v614
    %617 = vrot.lane.b32.xlu0 %v615, 64
    %v618 = vpop.permute.xlu0 %617
    %v620 = vmul.f32 %v601, %v618
    %622 = vrot.lane.b32.xlu0 %v620, 32
    %v623 = vpop.permute.xlu0 %622
    %v624 = vsel %vm218, %v623, 0
    %626 = vmatprep.subr.mxu0 0.0
    %627 = vmatpush1.msra.mxu0 %v214
    %628 = vmatprep.subr.mxu0 0.0
    %629 = vmatpush1.msra.mxu0 %v215
    %630 = vmatprep.subr.mxu0 0.0
    %631 = vmatpush1.msra.mxu0 %v216
    %632 = vmatprep.subr.mxu0 0.0
    %633 = vmatpush1.msra.mxu0 %v217
    %634 = vmatprep.subr.mxu0 0.0
    %635 = vmatpush1.msra.mxu0 0.0
    %636 = vmatprep.subr.mxu0 0.0
    %637 = vmatpush1.msra.mxu0 0.0
    %638 = vmatprep.subr.mxu0 0.0
    %639 = vmatpush1.msra.mxu0 0.0
    %640 = vmatprep.subr.mxu0 0.0
    %641 = vmatpush1.msra.mxu0 0.0
    %642 = vmatprep.subr.mxu0 0.0
    %643 = vmatpush1.msra.mxu0 0.0
    %644 = vmatprep.subr.mxu0 0.0
    %645 = vmatpush1.msra.mxu0 0.0
    %646 = vmatprep.subr.mxu0 0.0
    %647 = vmatpush1.msra.mxu0 0.0
    %648 = vmatprep.subr.mxu0 0.0
    %649 = vmatpush1.msra.mxu0 0.0
    %650 = vmatprep.subr.mxu0 0.0
    %651 = vmatpush1.msra.mxu0 0.0
    %652 = vmatprep.subr.mxu0 0.0
    %653 = vmatpush1.msra.mxu0 0.0
    %654 = vmatprep.subr.mxu0 0.0
    %655 = vmatpush1.msra.mxu0 0.0
    %656 = vmatprep.subr.mxu0 0.0
    %657 = vmatpush1.msra.mxu0 0.0
    %658 = vmatprep.subr.mxu0 0.0
    %659 = vmatpush1.msra.mxu0 0.0
    %660 = vmatprep.subr.mxu0 0.0
    %661 = vmatpush1.msra.mxu0 0.0
    %662 = vmatprep.subr.mxu0 0.0
    %663 = vmatpush1.msra.mxu0 0.0
    %664 = vmatprep.subr.mxu0 0.0
    %665 = vmatpush1.msra.mxu0 0.0
    %666 = vmatprep.subr.mxu0 0.0
    %667 = vmatpush1.msra.mxu0 0.0
    %668 = vmatprep.subr.mxu0 0.0
    %669 = vmatpush1.msra.mxu0 0.0
    %670 = vmatprep.subr.mxu0 0.0
    %671 = vmatpush1.msra.mxu0 0.0
    %672 = vmatprep.subr.mxu0 0.0
    %673 = vmatpush1.msra.mxu0 0.0
    %674 = vmatprep.subr.mxu0 0.0
    %675 = vmatpush1.msra.mxu0 0.0
    %676 = vmatprep.subr.mxu0 0.0
    %677 = vmatpush1.msra.mxu0 0.0
    %678 = vmatprep.subr.mxu0 0.0
    %679 = vmatpush1.msra.mxu0 0.0
    %680 = vmatprep.subr.mxu0 0.0
    %681 = vmatpush1.msra.mxu0 0.0
    %682 = vmatprep.subr.mxu0 0.0
    %683 = vmatpush1.msra.mxu0 0.0
    %684 = vmatprep.subr.mxu0 0.0
    %685 = vmatpush1.msra.mxu0 0.0
    %686 = vmatprep.subr.mxu0 0.0
    %687 = vmatpush1.msra.mxu0 0.0
    %688 = vmatprep.subr.mxu0 0.0
    %689 = vmatpush1.msra.mxu0 0.0
    %690 = vmatprep.mubr.f32.mxu0 0.0
    %691 = vmatmul.mubr.f32.gmra.mrb[0].mxu0 %v624
    %v692 = vpop.f32.mrb[0].mxu0
    %v693 = vadd.f32 0.0, %v692
    %v694 = vpop.f32.mrb[0].mxu0
    %695 = vdwg.mxu0
    %v696 = vadd.f32 %v196, %v693
    %v697 = vxor.u32 %v696, 2147483648
    %v698 = vmul.f32 %v697, 1.442695
    %v699 = vpow.pop %v698
    %v700 = vadd.f32 %v699, 1.0
    %v701 = vrcp.pop %v700
    %v702 = vmul.f32 1.0, %v701
    %v703 = vmul.f32 %v702, 2.0
    %v704 = vsub.f32 %v703, 1.0
    %v705 = vmul.f32 %v702, %v614
    %707 = vrot.lane.b32.xlu0 %v704, 64
    %v708 = vpop.permute.xlu0 %707
    %v710 = vmul.f32 %v702, %v708
    %712 = vrot.lane.b32.xlu0 %v710, 32
    %v713 = vpop.permute.xlu0 %712
    %v715 = vadd.f32 %v705, %v713
    %v716 = vtanh.pop %v715
    %718 = vrot.lane.b32.xlu0 %v716, 64
    %v719 = vpop.permute.xlu0 %718
    %v721 = vmul.f32 %v702, %v719
    %723 = vrot.lane.b32.xlu0 %v721, 32
    %v724 = vpop.permute.xlu0 %723
    %v725 = vsel %vm218, %v724, 0
    %727 = vmatprep.subr.mxu0 0.0
    %728 = vmatpush1.msra.mxu0 %v214
    %729 = vmatprep.subr.mxu0 0.0
    %730 = vmatpush1.msra.mxu0 %v215
    %731 = vmatprep.subr.mxu0 0.0
    %732 = vmatpush1.msra.mxu0 %v216
    %733 = vmatprep.subr.mxu0 0.0
    %734 = vmatpush1.msra.mxu0 %v217
    %735 = vmatprep.subr.mxu0 0.0
    %736 = vmatpush1.msra.mxu0 0.0
    %737 = vmatprep.subr.mxu0 0.0
    %738 = vmatpush1.msra.mxu0 0.0
    %739 = vmatprep.subr.mxu0 0.0
    %740 = vmatpush1.msra.mxu0 0.0
    %741 = vmatprep.subr.mxu0 0.0
    %742 = vmatpush1.msra.mxu0 0.0
    %743 = vmatprep.subr.mxu0 0.0
    %744 = vmatpush1.msra.mxu0 0.0
    %745 = vmatprep.subr.mxu0 0.0
    %746 = vmatpush1.msra.mxu0 0.0
    %747 = vmatprep.subr.mxu0 0.0
    %748 = vmatpush1.msra.mxu0 0.0
    %749 = vmatprep.subr.mxu0 0.0
    %750 = vmatpush1.msra.mxu0 0.0
    %751 = vmatprep.subr.mxu0 0.0
    %752 = vmatpush1.msra.mxu0 0.0
    %753 = vmatprep.subr.mxu0 0.0
    %754 = vmatpush1.msra.mxu0 0.0
    %755 = vmatprep.subr.mxu0 0.0
    %756 = vmatpush1.msra.mxu0 0.0
    %757 = vmatprep.subr.mxu0 0.0
    %758 = vmatpush1.msra.mxu0 0.0
    %759 = vmatprep.subr.mxu0 0.0
    %760 = vmatpush1.msra.mxu0 0.0
    %761 = vmatprep.subr.mxu0 0.0
    %762 = vmatpush1.msra.mxu0 0.0
    %763 = vmatprep.subr.mxu0 0.0
    %764 = vmatpush1.msra.mxu0 0.0
    %765 = vmatprep.subr.mxu0 0.0
    %766 = vmatpush1.msra.mxu0 0.0
    %767 = vmatprep.subr.mxu0 0.0
    %768 = vmatpush1.msra.mxu0 0.0
    %769 = vmatprep.subr.mxu0 0.0
    %770 = vmatpush1.msra.mxu0 0.0
    %771 = vmatprep.subr.mxu0 0.0
    %772 = vmatpush1.msra.mxu0 0.0
    %773 = vmatprep.subr.mxu0 0.0
    %774 = vmatpush1.msra.mxu0 0.0
    %775 = vmatprep.subr.mxu0 0.0
    %776 = vmatpush1.msra.mxu0 0.0
    %777 = vmatprep.subr.mxu0 0.0
    %778 = vmatpush1.msra.mxu0 0.0
    %779 = vmatprep.subr.mxu0 0.0
    %780 = vmatpush1.msra.mxu0 0.0
    %781 = vmatprep.subr.mxu0 0.0
    %782 = vmatpush1.msra.mxu0 0.0
    %783 = vmatprep.subr.mxu0 0.0
    %784 = vmatpush1.msra.mxu0 0.0
    %785 = vmatprep.subr.mxu0 0.0
    %786 = vmatpush1.msra.mxu0 0.0
    %787 = vmatprep.subr.mxu0 0.0
    %788 = vmatpush1.msra.mxu0 0.0
    %789 = vmatprep.subr.mxu0 0.0
    %790 = vmatpush1.msra.mxu0 0.0
    %791 = vmatprep.mubr.f32.mxu0 0.0
    %792 = vmatmul.mubr.f32.gmra.mrb[0].mxu0 %v725
    %v793 = vpop.f32.mrb[0].mxu0
    %v794 = vadd.f32 0.0, %v793
    %v795 = vpop.f32.mrb[0].mxu0
    %796 = vdwg.mxu0
    %v797 = vadd.f32 %v201, %v794
    %v798 = vxor.u32 %v797, 2147483648
    %v799 = vmul.f32 %v798, 1.442695
    %v800 = vpow.pop %v799
    %v801 = vadd.f32 %v800, 1.0
    %v802 = vrcp.pop %v801
    %v803 = vmul.f32 1.0, %v802
    %v804 = vmul.f32 %v803, 2.0
    %v805 = vsub.f32 %v804, 1.0
    %v806 = vmul.f32 %v803, %v715
    %808 = vrot.lane.b32.xlu0 %v805, 64
    %v809 = vpop.permute.xlu0 %808
    %v811 = vmul.f32 %v803, %v809
    %813 = vrot.lane.b32.xlu0 %v811, 32
    %v814 = vpop.permute.xlu0 %813
    %v816 = vadd.f32 %v806, %v814
    %v817 = vtanh.pop %v816
    %819 = vrot.lane.b32.xlu0 %v817, 64
    %v820 = vpop.permute.xlu0 %819
    %v822 = vmul.f32 %v803, %v820
    %824 = vrot.lane.b32.xlu0 %v822, 32
    %v825 = vpop.permute.xlu0 %824
    %v826 = vsel %vm218, %v825, 0
    %828 = vmatprep.subr.mxu0 0.0
    %829 = vmatpush1.msra.mxu0 %v214
    %830 = vmatprep.subr.mxu0 0.0
    %831 = vmatpush1.msra.mxu0 %v215
    %832 = vmatprep.subr.mxu0 0.0
    %833 = vmatpush1.msra.mxu0 %v216
    %834 = vmatprep.subr.mxu0 0.0
    %835 = vmatpush1.msra.mxu0 %v217
    %836 = vmatprep.subr.mxu0 0.0
    %837 = vmatpush1.msra.mxu0 0.0
    %838 = vmatprep.subr.mxu0 0.0
    %839 = vmatpush1.msra.mxu0 0.0
    %840 = vmatprep.subr.mxu0 0.0
    %841 = vmatpush1.msra.mxu0 0.0
    %842 = vmatprep.subr.mxu0 0.0
    %843 = vmatpush1.msra.mxu0 0.0
    %844 = vmatprep.subr.mxu0 0.0
    %845 = vmatpush1.msra.mxu0 0.0
    %846 = vmatprep.subr.mxu0 0.0
    %847 = vmatpush1.msra.mxu0 0.0
    %848 = vmatprep.subr.mxu0 0.0
    %849 = vmatpush1.msra.mxu0 0.0
    %850 = vmatprep.subr.mxu0 0.0
    %851 = vmatpush1.msra.mxu0 0.0
    %852 = vmatprep.subr.mxu0 0.0
    %853 = vmatpush1.msra.mxu0 0.0
    %854 = vmatprep.subr.mxu0 0.0
    %855 = vmatpush1.msra.mxu0 0.0
    %856 = vmatprep.subr.mxu0 0.0
    %857 = vmatpush1.msra.mxu0 0.0
    %858 = vmatprep.subr.mxu0 0.0
    %859 = vmatpush1.msra.mxu0 0.0
    %860 = vmatprep.subr.mxu0 0.0
    %861 = vmatpush1.msra.mxu0 0.0
    %862 = vmatprep.subr.mxu0 0.0
    %863 = vmatpush1.msra.mxu0 0.0
    %864 = vmatprep.subr.mxu0 0.0
    %865 = vmatpush1.msra.mxu0 0.0
    %866 = vmatprep.subr.mxu0 0.0
    %867 = vmatpush1.msra.mxu0 0.0
    %868 = vmatprep.subr.mxu0 0.0
    %869 = vmatpush1.msra.mxu0 0.0
    %870 = vmatprep.subr.mxu0 0.0
    %871 = vmatpush1.msra.mxu0 0.0
    %872 = vmatprep.subr.mxu0 0.0
    %873 = vmatpush1.msra.mxu0 0.0
    %874 = vmatprep.subr.mxu0 0.0
    %875 = vmatpush1.msra.mxu0 0.0
    %876 = vmatprep.subr.mxu0 0.0
    %877 = vmatpush1.msra.mxu0 0.0
    %878 = vmatprep.subr.mxu0 0.0
    %879 = vmatpush1.msra.mxu0 0.0
    %880 = vmatprep.subr.mxu0 0.0
    %881 = vmatpush1.msra.mxu0 0.0
    %882 = vmatprep.subr.mxu0 0.0
    %883 = vmatpush1.msra.mxu0 0.0
    %884 = vmatprep.subr.mxu0 0.0
    %885 = vmatpush1.msra.mxu0 0.0
    %886 = vmatprep.subr.mxu0 0.0
    %887 = vmatpush1.msra.mxu0 0.0
    %888 = vmatprep.subr.mxu0 0.0
    %889 = vmatpush1.msra.mxu0 0.0
    %890 = vmatprep.subr.mxu0 0.0
    %891 = vmatpush1.msra.mxu0 0.0
    %892 = vmatprep.mubr.f32.mxu0 0.0
    %893 = vmatmul.mubr.f32.gmra.mrb[0].mxu0 %v826
    %v894 = vpop.f32.mrb[0].mxu0
    %v895 = vadd.f32 0.0, %v894
    %v896 = vpop.f32.mrb[0].mxu0
    %897 = vdwg.mxu0
    %v898 = vadd.f32 %v206, %v895
    %v899 = vxor.u32 %v898, 2147483648
    %v900 = vmul.f32 %v899, 1.442695
    %v901 = vpow.pop %v900
    %v902 = vadd.f32 %v901, 1.0
    %v903 = vrcp.pop %v902
    %v904 = vmul.f32 1.0, %v903
    %v905 = vmul.f32 %v904, 2.0
    %v906 = vsub.f32 %v905, 1.0
    %v907 = vmul.f32 %v904, %v816
    %909 = vrot.lane.b32.xlu0 %v906, 64
    %v910 = vpop.permute.xlu0 %909
    %v912 = vmul.f32 %v904, %v910
    %914 = vrot.lane.b32.xlu0 %v912, 32
    %v915 = vpop.permute.xlu0 %914
    %v917 = vadd.f32 %v907, %v915
    %v918 = vtanh.pop %v917
    %920 = vrot.lane.b32.xlu0 %v918, 64
    %v921 = vpop.permute.xlu0 %920
    %v923 = vmul.f32 %v904, %v921
    %925 = vrot.lane.b32.xlu0 %v923, 32
    %v926 = vpop.permute.xlu0 %925
    %v927 = vsel %vm218, %v926, 0
    %929 = vmatprep.subr.mxu0 0.0
    %930 = vmatpush1.msra.mxu0 %v214
    %931 = vmatprep.subr.mxu0 0.0
    %932 = vmatpush1.msra.mxu0 %v215
    %933 = vmatprep.subr.mxu0 0.0
    %934 = vmatpush1.msra.mxu0 %v216
    %935 = vmatprep.subr.mxu0 0.0
    %936 = vmatpush1.msra.mxu0 %v217
    %937 = vmatprep.subr.mxu0 0.0
    %938 = vmatpush1.msra.mxu0 0.0
    %939 = vmatprep.subr.mxu0 0.0
    %940 = vmatpush1.msra.mxu0 0.0
    %941 = vmatprep.subr.mxu0 0.0
    %942 = vmatpush1.msra.mxu0 0.0
    %943 = vmatprep.subr.mxu0 0.0
    %944 = vmatpush1.msra.mxu0 0.0
    %945 = vmatprep.subr.mxu0 0.0
    %946 = vmatpush1.msra.mxu0 0.0
    %947 = vmatprep.subr.mxu0 0.0
    %948 = vmatpush1.msra.mxu0 0.0
    %949 = vmatprep.subr.mxu0 0.0
    %950 = vmatpush1.msra.mxu0 0.0
    %951 = vmatprep.subr.mxu0 0.0
    %952 = vmatpush1.msra.mxu0 0.0
    %953 = vmatprep.subr.mxu0 0.0
    %954 = vmatpush1.msra.mxu0 0.0
    %955 = vmatprep.subr.mxu0 0.0
    %956 = vmatpush1.msra.mxu0 0.0
    %957 = vmatprep.subr.mxu0 0.0
    %958 = vmatpush1.msra.mxu0 0.0
    %959 = vmatprep.subr.mxu0 0.0
    %960 = vmatpush1.msra.mxu0 0.0
    %961 = vmatprep.subr.mxu0 0.0
    %962 = vmatpush1.msra.mxu0 0.0
    %963 = vmatprep.subr.mxu0 0.0
    %964 = vmatpush1.msra.mxu0 0.0
    %965 = vmatprep.subr.mxu0 0.0
    %966 = vmatpush1.msra.mxu0 0.0
    %967 = vmatprep.subr.mxu0 0.0
    %968 = vmatpush1.msra.mxu0 0.0
    %969 = vmatprep.subr.mxu0 0.0
    %970 = vmatpush1.msra.mxu0 0.0
    %971 = vmatprep.subr.mxu0 0.0
    %972 = vmatpush1.msra.mxu0 0.0
    %973 = vmatprep.subr.mxu0 0.0
    %974 = vmatpush1.msra.mxu0 0.0
    %975 = vmatprep.subr.mxu0 0.0
    %976 = vmatpush1.msra.mxu0 0.0
    %977 = vmatprep.subr.mxu0 0.0
    %978 = vmatpush1.msra.mxu0 0.0
    %979 = vmatprep.subr.mxu0 0.0
    %980 = vmatpush1.msra.mxu0 0.0
    %981 = vmatprep.subr.mxu0 0.0
    %982 = vmatpush1.msra.mxu0 0.0
    %983 = vmatprep.subr.mxu0 0.0
    %984 = vmatpush1.msra.mxu0 0.0
    %985 = vmatprep.subr.mxu0 0.0
    %986 = vmatpush1.msra.mxu0 0.0
    %987 = vmatprep.subr.mxu0 0.0
    %988 = vmatpush1.msra.mxu0 0.0
    %989 = vmatprep.subr.mxu0 0.0
    %990 = vmatpush1.msra.mxu0 0.0
    %991 = vmatprep.subr.mxu0 0.0
    %992 = vmatpush1.msra.mxu0 0.0
    %993 = vmatprep.mubr.f32.mxu0 0.0
    %994 = vmatmul.mubr.f32.gmra.mrb[0].mxu0 %v927
    %v995 = vpop.f32.mrb[0].mxu0
    %v996 = vadd.f32 0.0, %v995
    %v997 = vpop.f32.mrb[0].mxu0
    %998 = vdwg.mxu0
    %v999 = vadd.f32 %v211, %v996
    %v1000 = vxor.u32 %v999, 2147483648
    %v1001 = vmul.f32 %v1000, 1.442695
    %v1002 = vpow.pop %v1001
    %v1003 = vadd.f32 %v1002, 1.0
    %v1004 = vrcp.pop %v1003
    %v1005 = vmul.f32 1.0, %v1004
    %v1006 = vmul.f32 %v1005, 2.0
    %v1007 = vsub.f32 %v1006, 1.0
    %v1008 = vmul.f32 %v1005, %v917
    %1010 = vrot.lane.b32.xlu0 %v1007, 64
    %v1011 = vpop.permute.xlu0 %1010
    %v1013 = vmul.f32 %v1005, %v1011
    %1015 = vrot.lane.b32.xlu0 %v1013, 32
    %v1016 = vpop.permute.xlu0 %1015
    %v1018 = vadd.f32 %v1008, %v1016
    %v1019 = vtanh.pop %v1018
    %1021 = vrot.lane.b32.xlu0 %v1019, 64
    %v1022 = vpop.permute.xlu0 %1021
    %v1024 = vmul.f32 %v1005, %v1022
    %v1025 = vld [vmem:[%s3] sm:$0xff]
    %v1026 = vld [vmem:[%s3 + $0x8] sm:$0xff]
    %v1027 = vld [vmem:[%s3 + $0x10] sm:$0xff]
    %v1028 = vld [vmem:[%s3 + $0x18] sm:$0xff]
    %v1029 = vld [vmem:[%s4] sm:$0x1]
    %v1031 = vlaneseq
    %v1032 = vshrl.u32 %v1031, 7
    %v1033 = vsub.s32 0, %v1032
    %v1034 = vrot.slane %v1029, %v1033
    %1037 = vrot.lane.b32.xlu0 %v1024, 32
    %v1038 = vpop.permute.xlu0 %1037
    %v1039 = vsel %vm218, %v1038, 0
    %1041 = vmatprep.subr.mxu0 0.0
    %1042 = vmatpush1.msra.mxu0 %v1025
    %1043 = vmatprep.subr.mxu0 0.0
    %1044 = vmatpush1.msra.mxu0 %v1026
    %1045 = vmatprep.subr.mxu0 0.0
    %1046 = vmatpush1.msra.mxu0 %v1027
    %1047 = vmatprep.subr.mxu0 0.0
    %1048 = vmatpush1.msra.mxu0 %v1028
    %1049 = vmatprep.subr.mxu0 0.0
    %1050 = vmatpush1.msra.mxu0 0.0
    %1051 = vmatprep.subr.mxu0 0.0
    %1052 = vmatpush1.msra.mxu0 0.0
    %1053 = vmatprep.subr.mxu0 0.0
    %1054 = vmatpush1.msra.mxu0 0.0
    %1055 = vmatprep.subr.mxu0 0.0
    %1056 = vmatpush1.msra.mxu0 0.0
    %1057 = vmatprep.subr.mxu0 0.0
    %1058 = vmatpush1.msra.mxu0 0.0
    %1059 = vmatprep.subr.mxu0 0.0
    %1060 = vmatpush1.msra.mxu0 0.0
    %1061 = vmatprep.subr.mxu0 0.0
    %1062 = vmatpush1.msra.mxu0 0.0
    %1063 = vmatprep.subr.mxu0 0.0
    %1064 = vmatpush1.msra.mxu0 0.0
    %1065 = vmatprep.subr.mxu0 0.0
    %1066 = vmatpush1.msra.mxu0 0.0
    %1067 = vmatprep.subr.mxu0 0.0
    %1068 = vmatpush1.msra.mxu0 0.0
    %1069 = vmatprep.subr.mxu0 0.0
    %1070 = vmatpush1.msra.mxu0 0.0
    %1071 = vmatprep.subr.mxu0 0.0
    %1072 = vmatpush1.msra.mxu0 0.0
    %1073 = vmatprep.subr.mxu0 0.0
    %1074 = vmatpush1.msra.mxu0 0.0
    %1075 = vmatprep.subr.mxu0 0.0
    %1076 = vmatpush1.msra.mxu0 0.0
    %1077 = vmatprep.subr.mxu0 0.0
    %1078 = vmatpush1.msra.mxu0 0.0
    %1079 = vmatprep.subr.mxu0 0.0
    %1080 = vmatpush1.msra.mxu0 0.0
    %1081 = vmatprep.subr.mxu0 0.0
    %1082 = vmatpush1.msra.mxu0 0.0
    %1083 = vmatprep.subr.mxu0 0.0
    %1084 = vmatpush1.msra.mxu0 0.0
    %1085 = vmatprep.subr.mxu0 0.0
    %1086 = vmatpush1.msra.mxu0 0.0
    %1087 = vmatprep.subr.mxu0 0.0
    %1088 = vmatpush1.msra.mxu0 0.0
    %1089 = vmatprep.subr.mxu0 0.0
    %1090 = vmatpush1.msra.mxu0 0.0
    %1091 = vmatprep.subr.mxu0 0.0
    %1092 = vmatpush1.msra.mxu0 0.0
    %1093 = vmatprep.subr.mxu0 0.0
    %1094 = vmatpush1.msra.mxu0 0.0
    %1095 = vmatprep.subr.mxu0 0.0
    %1096 = vmatpush1.msra.mxu0 0.0
    %1097 = vmatprep.subr.mxu0 0.0
    %1098 = vmatpush1.msra.mxu0 0.0
    %1099 = vmatprep.subr.mxu0 0.0
    %1100 = vmatpush1.msra.mxu0 0.0
    %1101 = vmatprep.subr.mxu0 0.0
    %1102 = vmatpush1.msra.mxu0 0.0
    %1103 = vmatprep.subr.mxu0 0.0
    %1104 = vmatpush1.msra.mxu0 0.0
    %1105 = vmatprep.mubr.f32.mxu0 0.0
    %1106 = vmatmul.mubr.f32.gmra.mrb[0].mxu0 %v1039
    %v1107 = vpop.f32.mrb[0].mxu0
    %v1108 = vadd.f32 %v1034, %v1107
    %v1109 = vpop.f32.mrb[0].mxu0
    %1110 = vdwg.mxu0
    %v1111 = vxor.u32 %v1108, 2147483648
    %v1112 = vmul.f32 %v1111, 1.442695
    %v1113 = vpow.pop %v1112
    %v1114 = vadd.f32 %v1113, 1.0
    %v1115 = vrcp.pop %v1114
    %v1116 = vmul.f32 1.0, %v1115
    %1117 = vst [vmem:[#allocation5] sm:$0xff] %v1116
    // Predicated region
    $region26: #{simple_lstm_forward.1} parent=1 // pred_check
      _
    $region27: #{simple_lstm_forward.1} parent=1 // pred_check_branch
      %1119 = sbr.rel (0) target = $region29
    $region28: #{simple_lstm_forward.1} parent=1 // pred_region
      %s1121 = ssub.s32 128, 128
      %1122 = vsyncadd [#allocation4], %s1121
      %s1124 = sshll.u32 [#allocation5], 4
      %s1125 = int_to_ptr.vmem [resolvable:$true] %s1124
      %1127 = dma.vmem_to_hbm [thread:$0]  %s1125, 128, %s5, [#allocation4]
    $region29: #{simple_lstm_forward.1} parent=1 // pred_fallthru
      _
    // Predicated region
    $region30: #{simple_lstm_forward.1} parent=1 // pred_check
      _
    $region31: #{simple_lstm_forward.1} parent=1 // pred_check_branch
      %1129 = sbr.rel (0) target = $region33
    $region32: #{simple_lstm_forward.1} parent=1 // pred_region
      %1130 = dma.done [#allocation4], 128
    $region33: #{simple_lstm_forward.1} parent=1 // pred_fallthru
      _
    %1131 = vsyncpa [#allocation3], 1
    %1132 = vsyncpa [#allocation4], 1

</llo_original>
